<compile_context>
chip_gen: v6e
topology: v6e:2x2x1
jax: 0.10.0
libtpu: 0.0.40
codegen_flags: <defaults>
</compile_context>

<pallas_src>
import functools

import jax
import jax.numpy as jnp
from jax.experimental import pallas as pl
from jax.experimental.pallas import tpu as pltpu


# -----------------------------------------------------------------------------
# Kernel: per (batch b, spatial tile t, voxel chunk k) accumulate
#     acc[c, p] += sum_v feats[c, v] * (key[v] == b*P_pad + t*tile_p + p)
# -----------------------------------------------------------------------------
def _densify_kernel(cidx_ref, ncnt_ref, key_ref, feats_ref, o_ref, acc_ref, *,
                    n_tiles, tile_p, p_total_pad):
    # cidx_ref : SMEM (n_buckets*max_chunks,) i32  -- used only by index_maps
    # ncnt_ref : SMEM (n_buckets,)            i32  -- #chunks for bucket (b,t)
    # key_ref  : VMEM (tile_k, 1)  i32  merged batch*P_pad + pos key (sorted)
    # feats_ref: VMEM (C, tile_k)  f32  sorted, transposed features chunk
    # o_ref    : VMEM (C, tile_p)  f32  dense output slab for this (b, t)
    # acc_ref  : VMEM (C, tile_p)  f32  accumulator scratch
    b = pl.program_id(0)
    t = pl.program_id(1)
    k = pl.program_id(2)
    nk = ncnt_ref[b * n_tiles + t]

    @pl.when(k == 0)
    def _():
        acc_ref[...] = jnp.zeros_like(acc_ref)

    @pl.when(k < nk)
    def _():
        base = b * p_total_pad + t * tile_p
        lane = jax.lax.broadcasted_iota(jnp.int32, key_ref.shape[:1] + o_ref.shape[-1:], 1)
        # 2 full-size VPU passes: one compare, one cast.  Voxels of other
        # batches / tiles and padding (sentinel key) can never match.
        sel = ((key_ref[...] - base) == lane).astype(jnp.float32)
        acc_ref[...] += jnp.dot(feats_ref[...], sel,
                                preferred_element_type=jnp.float32)

    @pl.when(k == pl.num_programs(2) - 1)
    def _():
        o_ref[...] = acc_ref[...].astype(o_ref.dtype)


def _round_up(x, m):
    return ((x + m - 1) // m) * m


# -----------------------------------------------------------------------------
# Wrapper: HeightCompression.forward
# -----------------------------------------------------------------------------
def height_compression(features, indices, batch_size, spatial_shape, *,
                       tile_p=None, tile_k=256):
    """Sparse (features, indices) -> dense (N, C, D, H, W) -> view (N, C*D, H, W)."""
    D, H, W = spatial_shape
    nv, c = features.shape
    p_total = D * H * W

    # Lane-dense output tile; multiple of 256 (v6e/v7x 2x256 MXU, also fine on
    # v5e's 4x128 MXU).  The flattened position axis is padded up to tile_p so
    # stores stay unmasked even when D*H*W % 128 != 0.
    if tile_p is None:
        tile_p = 1024 if p_total >= 1024 else (512 if p_total >= 512 else 256)
    p_total_pad = _round_up(p_total, tile_p)
    n_tiles = p_total_pad // tile_p

    # Voxel chunk (MXU contraction dim), multiple of 256.
    nv_pad = max(tile_k, _round_up(nv, tile_k))
    n_blocks = nv_pad // tile_k

    idx = indices.astype(jnp.int32)
    pos = idx[:, 1] * (H * W) + idx[:, 2] * W + idx[:, 3]
    # Merged key: bucket (b, t) owns keys [bucket_id*tile_p, (bucket_id+1)*tile_p).
    key = idx[:, 0] * p_total_pad + pos                       # (nv,)
    # Sentinel for padded rows: larger than every valid key AND at least
    # tile_p above every tile base, so it can never match in the kernel.
    sentinel = batch_size * p_total_pad

    order = jnp.argsort(key)
    key_s = jnp.concatenate(
        [key[order], jnp.full((nv_pad - nv,), sentinel, jnp.int32)])
    feats_s = jnp.concatenate(
        [features[order].astype(jnp.float32),
         jnp.zeros((nv_pad - nv, c), jnp.float32)], axis=0)
    feats_t = jnp.transpose(feats_s, (1, 0))                  # (C, nv_pad)
    key_col = key_s.reshape(nv_pad, 1)

    # Per-(batch, tile) bucket [start, end) offsets in the sorted voxel array.
    n_buckets = batch_size * n_tiles
    bases = jnp.arange(n_buckets, dtype=jnp.int32) * tile_p
    starts = jnp.searchsorted(key_s, bases, side="left")
    ends = jnp.searchsorted(key_s, bases + tile_p, side="left")
    counts = ends - starts

    # Static upper bound on voxel chunks per bucket (unique coords => at most
    # tile_p voxels per bucket, possibly straddling one extra chunk boundary).
    max_chunks = int(min(n_blocks, -(-min(max(nv, 1), tile_p) // tile_k) + 1))

    first_block = starts // tile_k
    num_chunks = jnp.where(counts > 0,
                           (ends - 1) // tile_k - first_block + 1, 0)
    num_chunks = jnp.minimum(num_chunks, max_chunks)

    # Flattened (SMEM-friendly, 1-D) chunk-index table for the index_maps,
    # clamped so the index_map always returns an in-range block.
    cidx = jnp.minimum(first_block[:, None] + jnp.arange(max_chunks)[None, :],
                       n_blocks - 1).astype(jnp.int32).reshape(-1)
    ncnt = num_chunks.astype(jnp.int32)

    kernel = functools.partial(_densify_kernel, n_tiles=n_tiles,
                               tile_p=tile_p, p_total_pad=p_total_pad)

    def key_map(b, t, k, ci, nc):
        return (ci[(b * n_tiles + t) * max_chunks + k], 0)

    def feats_map(b, t, k, ci, nc):
        return (0, ci[(b * n_tiles + t) * max_chunks + k])

    def out_map(b, t, k, ci, nc):
        return (b, 0, t)

    out = pl.pallas_call(
        kernel,
        out_shape=jax.ShapeDtypeStruct((batch_size, c, p_total_pad),
                                       jnp.float32),
        grid_spec=pltpu.PrefetchScalarGridSpec(
            num_scalar_prefetch=2,
            grid=(batch_size, n_tiles, max_chunks),
            in_specs=[
                pl.BlockSpec((tile_k, 1), key_map),
                pl.BlockSpec((c, tile_k), feats_map),
            ],
            out_specs=pl.BlockSpec((None, c, tile_p), out_map),
            scratch_shapes=[pltpu.VMEM((c, tile_p), jnp.float32)],
        ),
        compiler_params=pltpu.CompilerParams(
            dimension_semantics=("parallel", "parallel", "arbitrary")),
    )(cidx, ncnt, key_col, feats_t)

    if p_total_pad != p_total:
        out = out[:, :, :p_total]
    # (N, C, D*H*W) is row-major-identical to (N, C, D, H, W).view(N, C*D, H, W):
    # this reshape is metadata-only (no HBM pass).
    return out.reshape(batch_size, c * D, H, W)


# -----------------------------------------------------------------------------
# Self-test
# -----------------------------------------------------------------------------
if __name__ == "__main__":
    N, C, D, H, W = 2, 4, 2, 16, 16
    nv_per_batch = 40

    key0 = jax.random.PRNGKey(0)
    k_feat, k_perm = jax.random.split(key0)

    # Deterministic, unique voxel coordinates per batch element (mimics a
    # valid spconv sparse tensor: no duplicate indices).
    idx_list = []
    for b in range(N):
        k_perm, sub = jax.random.split(k_perm)
        flat = jax.random.permutation(sub, D * H * W)[:nv_per_batch]
        d = (flat // (H * W)).astype(jnp.int32)
        h = ((flat // W) % H).astype(jnp.int32)
        w = (flat % W).astype(jnp.int32)
        bcol = jnp.full((nv_per_batch,), b, jnp.int32)
        idx_list.append(jnp.stack([bcol, d, h, w], axis=1))
    indices = jnp.concatenate(idx_list, axis=0)                     # (Nv, 4)
    nv_total = indices.shape[0]
    features = jax.random.normal(k_feat, (nv_total, C), jnp.float32)

    spatial_features = height_compression(features, indices, N, (D, H, W))
    jax.block_until_ready(spatial_features)

    # Pure-JAX reference: scatter into (N, D*H*W, C), transpose to (N, C, P),
    # then view as (N, C*D, H, W).
    flat_pos = indices[:, 1] * (H * W) + indices[:, 2] * W + indices[:, 3]
    dense = jnp.zeros((N, D * H * W, C), jnp.float32)
    dense = dense.at[indices[:, 0], flat_pos].set(features)
    ref = jnp.transpose(dense, (0, 2, 1)).reshape(N, C * D, H, W)

    assert spatial_features.shape == (N, C * D, H, W)
    assert bool(jnp.allclose(spatial_features, ref, atol=1e-5, rtol=1e-5))
    print("KERNEL_OK")
</pallas_src>

<mosaic_0001>
module attributes {stable_mosaic.version = 11 : i64} {
  func.func @_densify_kernel(%arg0: i32, %arg1: i32, %arg2: i32, %arg3: memref<2xi32, #tpu.memory_space<smem>>, %arg4: memref<2xi32, #tpu.memory_space<smem>>, %arg5: memref<256x1xi32, #tpu.memory_space<vmem>>, %arg6: memref<4x256xf32, #tpu.memory_space<vmem>>, %arg7: memref<1x4x512xf32, #tpu.memory_space<vmem>>, %arg8: memref<4x512xf32, #tpu.memory_space<vmem>>) attributes {dimension_semantics = [#tpu.dimension_semantics<parallel>, #tpu.dimension_semantics<parallel>, #tpu.dimension_semantics<arbitrary>], iteration_bounds = array<i64: 2, 1, 1>, scalar_prefetch = 2 : i64, scratch_operands = 1 : i64, tpu.core_type = #tpu.core_type<tc>, window_params = [{transform_indices = @transform_0, window_bounds = array<i64: 256, 1>}, {transform_indices = @transform_1, window_bounds = array<i64: 4, 256>}, {transform_indices = @transform_2, window_bounds = array<i64: 1, 4, 512>}]} {
    %c1_i32 = arith.constant 1 : i32
    %0 = arith.muli %arg0, %c1_i32 : i32
    %1 = arith.addi %0, %arg1 : i32
    %2 = arith.index_cast %1 : i32 to index
    %3 = memref.load %arg4[%2] : memref<2xi32, #tpu.memory_space<smem>>
    %c0_i32 = arith.constant 0 : i32
    %4 = arith.cmpi eq, %arg2, %c0_i32 : i32
    %5 = arith.extui %4 : i1 to i32
    %c0_i32_0 = arith.constant 0 : i32
    %6 = arith.cmpi ne, %5, %c0_i32_0 : i32
    scf.if %6 {
      %cst = arith.constant 0.000000e+00 : f32
      %13 = vector.broadcast %cst : f32 to vector<4x512xf32>
      %c0 = arith.constant 0 : index
      %c0_4 = arith.constant 0 : index
      %14 = vector.load %arg8[%c0, %c0_4] : memref<4x512xf32, #tpu.memory_space<vmem>>, vector<4x512xf32>
      tpu.vector_store %arg8[%c0, %c0_4], %13 {strides = array<i32>} : memref<4x512xf32, #tpu.memory_space<vmem>>, vector<4x512xf32>,
    } else {
    }
    %7 = arith.cmpi slt, %arg2, %3 : i32
    %8 = arith.extui %7 : i1 to i32
    %c0_i32_1 = arith.constant 0 : i32
    %9 = arith.cmpi ne, %8, %c0_i32_1 : i32
    scf.if %9 {
      %c512_i32 = arith.constant 512 : i32
      %13 = arith.muli %arg0, %c512_i32 : i32
      %c512_i32_4 = arith.constant 512 : i32
      %14 = arith.muli %arg1, %c512_i32_4 : i32
      %15 = arith.addi %13, %14 : i32
      %16 = tpu.iota {dimensions = array<i32: 1>} : vector<256x512xi32>
      %c0 = arith.constant 0 : index
      %c0_5 = arith.constant 0 : index
      %17 = vector.load %arg5[%c0, %c0_5] : memref<256x1xi32, #tpu.memory_space<vmem>>, vector<256x1xi32>
      %18 = vector.broadcast %15 : i32 to vector<256x1xi32>
      %19 = arith.subi %17, %18 : vector<256x1xi32>
      %20 = vector.broadcast %19 : vector<256x1xi32> to vector<256x512xi32>
      %21 = arith.cmpi eq, %20, %16 : vector<256x512xi32>
      %22 = arith.extui %21 : vector<256x512xi1> to vector<256x512xi32>
      %23 = arith.sitofp %22 : vector<256x512xi32> to vector<256x512xf32>
      %c0_6 = arith.constant 0 : index
      %c0_7 = arith.constant 0 : index
      %24 = vector.load %arg8[%c0_6, %c0_7] : memref<4x512xf32, #tpu.memory_space<vmem>>, vector<4x512xf32>
      %c0_8 = arith.constant 0 : index
      %c0_9 = arith.constant 0 : index
      %25 = vector.load %arg6[%c0_8, %c0_9] : memref<4x256xf32, #tpu.memory_space<vmem>>, vector<4x256xf32>
      %cst = arith.constant dense<0.000000e+00> : vector<4x512xf32>
      %26 = tpu.matmul %25, %23, %cst {dimension_numbers = #tpu.dot_dimension_numbers<[1], [0], [0], [1], [0, 0, 1, 1], [], []>} : vector<4x256xf32>, vector<256x512xf32>, vector<4x512xf32> -> vector<4x512xf32>
      %27 = arith.addf %24, %26 : vector<4x512xf32>
      %c0_10 = arith.constant 0 : index
      %c0_11 = arith.constant 0 : index
      %28 = vector.load %arg8[%c0_10, %c0_11] : memref<4x512xf32, #tpu.memory_space<vmem>>, vector<4x512xf32>
      tpu.vector_store %arg8[%c0_10, %c0_11], %27 {strides = array<i32>} : memref<4x512xf32, #tpu.memory_space<vmem>>, vector<4x512xf32>,
    } else {
    }
    %c0_i32_2 = arith.constant 0 : i32
    %10 = arith.cmpi eq, %arg2, %c0_i32_2 : i32
    %11 = arith.extui %10 : i1 to i32
    %c0_i32_3 = arith.constant 0 : i32
    %12 = arith.cmpi ne, %11, %c0_i32_3 : i32
    scf.if %12 {
      %c0 = arith.constant 0 : index
      %c0_4 = arith.constant 0 : index
      %13 = vector.load %arg8[%c0, %c0_4] : memref<4x512xf32, #tpu.memory_space<vmem>>, vector<4x512xf32>
      %c0_5 = arith.constant 0 : index
      %c0_6 = arith.constant 0 : index
      %c0_7 = arith.constant 0 : index
      %14 = vector.load %arg7[%c0_5, %c0_6, %c0_7] : memref<1x4x512xf32, #tpu.memory_space<vmem>>, vector<1x4x512xf32>
      %15 = vector.shape_cast %14 : vector<1x4x512xf32> to vector<4x512xf32>
      %16 = vector.shape_cast %13 : vector<4x512xf32> to vector<1x4x512xf32>
      tpu.vector_store %arg7[%c0_5, %c0_6, %c0_7], %16 {strides = array<i32>} : memref<1x4x512xf32, #tpu.memory_space<vmem>>, vector<1x4x512xf32>,
    } else {
    }
    return
  }
  func.func @transform_0(%arg0: i32, %arg1: i32, %arg2: i32, %arg3: memref<2xi32, #tpu.memory_space<smem>>, %arg4: memref<2xi32, #tpu.memory_space<smem>>) -> (i32, i32) {
    %c1_i32 = arith.constant 1 : i32
    %0 = arith.muli %arg0, %c1_i32 : i32
    %1 = arith.addi %0, %arg1 : i32
    %c1_i32_0 = arith.constant 1 : i32
    %2 = arith.muli %1, %c1_i32_0 : i32
    %3 = arith.addi %2, %arg2 : i32
    %4 = arith.index_cast %3 : i32 to index
    %5 = memref.load %arg3[%4] : memref<2xi32, #tpu.memory_space<smem>>
    %c0_i32 = arith.constant 0 : i32
    %c0_i32_1 = arith.constant 0 : i32
    return %5, %c0_i32 : i32, i32
  }
  func.func @transform_1(%arg0: i32, %arg1: i32, %arg2: i32, %arg3: memref<2xi32, #tpu.memory_space<smem>>, %arg4: memref<2xi32, #tpu.memory_space<smem>>) -> (i32, i32) {
    %c1_i32 = arith.constant 1 : i32
    %0 = arith.muli %arg0, %c1_i32 : i32
    %1 = arith.addi %0, %arg1 : i32
    %c1_i32_0 = arith.constant 1 : i32
    %2 = arith.muli %1, %c1_i32_0 : i32
    %3 = arith.addi %2, %arg2 : i32
    %4 = arith.index_cast %3 : i32 to index
    %5 = memref.load %arg3[%4] : memref<2xi32, #tpu.memory_space<smem>>
    %c0_i32 = arith.constant 0 : i32
    %c0_i32_1 = arith.constant 0 : i32
    return %c0_i32, %5 : i32, i32
  }
  func.func @transform_2(%arg0: i32, %arg1: i32, %arg2: i32, %arg3: memref<2xi32, #tpu.memory_space<smem>>, %arg4: memref<2xi32, #tpu.memory_space<smem>>) -> (i32, i32, i32) {
    %c0_i32 = arith.constant 0 : i32
    %c0_i32_0 = arith.constant 0 : i32
    return %arg0, %c0_i32, %arg1 : i32, i32, i32
  }
}

</mosaic_0001>

<llo_original>
// kernel: tpu_custom_call.1
$region0: #{tpu_custom_call.1}
  #allocation0 [shape = 'u32[]', space=smem, size = 0x4, offset = 0x4, fixed_abs, tag = 'smem constant byte address 0x4 - core index']
  #allocation1 [shape = 'u32[144,128]{1,0:T(1,128)}', space=vmem, size = 0x12000, scoped, tag = 'internal scratch']
  #allocation2 [shape = 'f32[4,512]{1,0:T(4,128)}', space=vmem, size = 0x2000, scoped, tag = 'scratch operand']
  #allocation3 [shape = 's32[1]{0}', space=sflag, size = 0x4, scoped, tag = 'scoped memory for tpu_custom_call.1']
  #allocation4 [shape = 'u8[512]{0}', space=smem, size = 0x200, scoped, tag = 'prefetched SMEM operand 0']
  #allocation5 [shape = 'u8[512]{0}', space=smem, size = 0x200, scoped, tag = 'prefetched SMEM operand 1']
  %s0 = inlined_call_operand.vmem [shape: s32[2], index: 0, kind: input, shape index: {}]
  %s1 = inlined_call_operand.vmem [shape: s32[2], index: 1, kind: input, shape index: {}]
  %s2 = inlined_call_operand.vmem [shape: s32[256,1], index: 2, kind: input, shape index: {}]
  %s3 = inlined_call_operand.vmem [shape: f32[4,256], index: 3, kind: input, shape index: {}]
  %s4 = inlined_call_operand.hbm [shape: f32[2,4,512], index: 4, kind: output, shape index: {}]
  %s5 = sld [smem:[#allocation0]]
  $region53: #{tpu_custom_call.1} parent=0
    _
  %s7 = ssub.s32 1, %s5
  %s8 = scalar_select 0, %s7, %s5
  %s9 = sshll.u32 %s0, 4
  %s10 = int_to_ptr.vmem [resolvable:$true] %s9
  %12 = dma.vmem_to_smem %s10, 16, [#allocation4], [#allocation3]
  %s13 = sshll.u32 %s1, 4
  %s14 = int_to_ptr.vmem [resolvable:$true] %s13
  %16 = dma.vmem_to_smem %s14, 16, [#allocation5], [#allocation3]
  %17 = dma.done [#allocation3], 32
  %18 = sfence
  $region1: #{tpu_custom_call.1} parent=0
    #allocation6 [shape = 'u8[16384]{0}', space=vmem, size = 0x4000, scoped, tag = 'output window, operand 0']
    #allocation7 [shape = 's32[2]{0}', space=sflag, size = 0x8, scoped, tag = 'scoped memory for tpu_custom_call.1']
    %19 = vsyncpa [#allocation7], 0
    %s20 = scalar_lea.sflag [#allocation7], 1
    %21 = vsyncpa %s20, 0
    loop: start=0, step=1, limit=4
    $region2: #{tpu_custom_call.1} parent=1 // loop_pre_header
      _
    $region3: #{tpu_custom_call.1} parent=1 // loop_header
      %s23 = sphi 0, %s27
      %p24 = scmp.ge.s32.totalorder %s23, 4
      %s30 = sphi 0, %s49
      %s31 = sphi 0, %s45
      %s32 = sphi 0, %s41
      %s33 = sphi 0, %s30
      %s34 = sphi 0, %s31
      %s35 = sphi 0, %s32
      %s36 = sphi 0, %s33
      %s37 = sphi 0, %s34
      %s38 = sphi 0, %s35
      %s58 = sphi 0, %s60
      %s61 = sphi 0, %s58
      %s62 = sphi 0, %s61
      %s78 = sphi 0, %s62
      %s90 = sphi 0, %s92
      %s93 = sphi 0, %s90
      %s94 = sphi 0, %s93
      %s110 = sphi 0, %s94
      %s118 = sphi 0, %s120
      %s121 = sphi 0, %s118
      %s122 = sphi 0, %s121
      %s138 = sphi 0, %s122
    $region4: #{tpu_custom_call.1} parent=1 // loop_header_branch
      %26 = sbr.rel (%p24) target = $region8
    $region5: #{tpu_custom_call.1} parent=1 // loop_body
      %s28 = ssub.s32 %s23, 1
      %s29 = ssub.s32 %s23, 2
      %s39 = sadd.s32 1, %s32
      %p40 = scmp.ge.s32.totalorder %s39, 1
      %s41 = scalar_select %p40, 0, %s39
      %s42 = sadd.s32 1, %s31
      %s43 = scalar_select %p40, %s42, %s31
      %p44 = scmp.ge.s32.totalorder %s43, 1
      %s45 = scalar_select %p44, 0, %s43
      %s46 = sadd.s32 1, %s30
      %s47 = scalar_select %p44, %s46, %s30
      %p48 = scmp.ge.s32.totalorder %s47, 2
      %s49 = scalar_select %p48, 0, %s47
      %s50 = sadd.s32 %s30, %s31
      %s51 = sadd.s32 %s50, %s32
      %s52 = sld [smem:[#allocation4 + %s51]]
      %s53 = sadd.s32 %s49, %s45
      %s54 = sadd.s32 %s53, %s41
      %s55 = sld [smem:[#allocation4 + %s54]]
      %s56 = ssub.s32 %s52, %s55
      %p57 = scmp.eq.s32.totalorder %s56, 0
      %s59 = sadd.s32 %s58, 1
      %s60 = scalar_select %p57, %s58, %s59
      %p63 = pneg %p57
      %p64 = scmp.eq.s32.totalorder %s23, 1
      %p65 = por %p63, %p64
      %p66 = scmp.ne.s32.totalorder %s58, %s61
      %p67 = scmp.eq.s32.totalorder %s23, 0
      %p68 = por %p66, %p67
      %p69 = scmp.ne.s32.totalorder %s58, %s61
      %p70 = scmp.eq.s32.totalorder %s28, 1
      %p71 = por %p69, %p70
      %p72 = scmp.ne.s32.totalorder %s61, %s62
      %p73 = scmp.eq.s32.totalorder %s28, 0
      %p74 = por %p72, %p73
      %p75 = scmp.ne.s32.totalorder %s61, %s62
      %p76 = scmp.eq.s32.totalorder %s29, 1
      %p77 = por %p75, %p76
      %p79 = scmp.ne.s32.totalorder %s62, %s78
      %p80 = scmp.eq.s32.totalorder %s29, 0
      %p81 = por %p79, %p80
      %s82 = sadd.s32 %s30, %s31
      %s83 = sadd.s32 %s82, %s32
      %s84 = sld [smem:[#allocation4 + %s83]]
      %s85 = sadd.s32 %s49, %s45
      %s86 = sadd.s32 %s85, %s41
      %s87 = sld [smem:[#allocation4 + %s86]]
      %s88 = ssub.s32 %s84, %s87
      %p89 = scmp.eq.s32.totalorder %s88, 0
      %s91 = sadd.s32 %s90, 1
      %s92 = scalar_select %p89, %s90, %s91
      %p95 = pneg %p89
      %p96 = scmp.eq.s32.totalorder %s23, 1
      %p97 = por %p95, %p96
      %p98 = scmp.ne.s32.totalorder %s90, %s93
      %p99 = scmp.eq.s32.totalorder %s23, 0
      %p100 = por %p98, %p99
      %p101 = scmp.ne.s32.totalorder %s90, %s93
      %p102 = scmp.eq.s32.totalorder %s28, 1
      %p103 = por %p101, %p102
      %p104 = scmp.ne.s32.totalorder %s93, %s94
      %p105 = scmp.eq.s32.totalorder %s28, 0
      %p106 = por %p104, %p105
      %p107 = scmp.ne.s32.totalorder %s93, %s94
      %p108 = scmp.eq.s32.totalorder %s29, 1
      %p109 = por %p107, %p108
      %p111 = scmp.ne.s32.totalorder %s94, %s110
      %p112 = scmp.eq.s32.totalorder %s29, 0
      %p113 = por %p111, %p112
      %s114 = ssub.s32 %s30, %s49
      %s115 = ssub.s32 %s31, %s45
      %s116 = sor.u32 %s114, %s115
      %p117 = scmp.eq.s32.totalorder %s116, 0
      %s119 = sadd.s32 %s118, 1
      %s120 = scalar_select %p117, %s118, %s119
      %p123 = pneg %p117
      %p124 = scmp.eq.s32.totalorder %s23, 1
      %p125 = por %p123, %p124
      %p126 = scmp.ne.s32.totalorder %s118, %s121
      %p127 = scmp.eq.s32.totalorder %s23, 0
      %p128 = por %p126, %p127
      %p129 = scmp.ne.s32.totalorder %s118, %s121
      %p130 = scmp.eq.s32.totalorder %s28, 1
      %p131 = por %p129, %p130
      %p132 = scmp.ne.s32.totalorder %s121, %s122
      %p133 = scmp.eq.s32.totalorder %s28, 0
      %p134 = por %p132, %p133
      %p135 = scmp.ne.s32.totalorder %s121, %s122
      %p136 = scmp.eq.s32.totalorder %s29, 1
      %p137 = por %p135, %p136
      %p139 = scmp.ne.s32.totalorder %s122, %s138
      %p140 = scmp.eq.s32.totalorder %s29, 0
      %p141 = por %p139, %p140
      %p142 = scmp.le.s32.totalorder 1, %s23
      %p143 = scmp.lt.s32.totalorder %s23, 3
      %p144 = pnand %p142, %p143
      %p145 = pneg %p144
      // Predicated region
      $region9: #{tpu_custom_call.1} parent=5 // pred_check
        _
      $region10: #{tpu_custom_call.1} parent=5 // pred_check_branch
        %147 = sbr.rel (%p144) target = $region12
      $region11: #{tpu_custom_call.1} parent=5 // pred_region
        %s148 = ssub.s32 %s23, 1
      $region12: #{tpu_custom_call.1} parent=5 // pred_fallthru
        _
      %p149 = scmp.lt.s32.totalorder %s23, 2
      // Predicated region
      $region13: #{tpu_custom_call.1} parent=5 // pred_check
        %p150 = pneg %p149
      $region14: #{tpu_custom_call.1} parent=5 // pred_check_branch
        %152 = sbr.rel (%p150) target = $region16
      $region15: #{tpu_custom_call.1} parent=5 // pred_region
        // Predicated region
        $region17: #{tpu_custom_call.1} parent=15 // pred_check
          %p153 = pneg %p68
        $region18: #{tpu_custom_call.1} parent=15 // pred_check_branch
          %155 = sbr.rel (%p153) target = $region20
        $region19: #{tpu_custom_call.1} parent=15 // pred_region
          %s156 = sadd.s32 %s30, %s31
          %s157 = sadd.s32 %s156, %s32
          %s158 = sld [smem:[#allocation4 + %s157]]
          %s159 = smul.u32 32, %s158
          %p160 = scmp.lt.s32.totalorder %s159, 31
          %s161 = scalar_select %p160, %s159, 31
          %s162 = smul.addr %s161, 8
          %s163 = scalar_lea.vmem %s2, %s162
          %s164 = sadd.s32 %s30, %s31
          %s165 = sadd.s32 %s164, %s32
          %s166 = sld [smem:[#allocation4 + %s165]]
          %s167 = smul.u32 32, %s166
        $region20: #{tpu_custom_call.1} parent=15 // pred_fallthru
          _
        // Predicated region
        $region21: #{tpu_custom_call.1} parent=15 // pred_check
          %p168 = pneg %p100
        $region22: #{tpu_custom_call.1} parent=15 // pred_check_branch
          %170 = sbr.rel (%p168) target = $region24
        $region23: #{tpu_custom_call.1} parent=15 // pred_region
          %s171 = sadd.s32 %s30, %s31
          %s172 = sadd.s32 %s171, %s32
          %s173 = sld [smem:[#allocation4 + %s172]]
          %s174 = smul.u32 2, %s173
          %p175 = scmp.lt.s32.totalorder %s174, 1
          %s176 = scalar_select %p175, %s174, 1
          %s177 = smul.addr %s176, 4
          %s178 = scalar_lea.vmem %s3, %s177
          %s179 = sadd.s32 %s30, %s31
          %s180 = sadd.s32 %s179, %s32
          %s181 = sld [smem:[#allocation4 + %s180]]
          %s182 = smul.u32 2, %s181
        $region24: #{tpu_custom_call.1} parent=15 // pred_fallthru
          _
      $region16: #{tpu_custom_call.1} parent=5 // pred_fallthru
        _
      %p183 = scmp.le.s32.totalorder 1, %s23
      %p184 = scmp.lt.s32.totalorder %s23, 3
      %p185 = pnand %p183, %p184
      %p186 = pneg %p185
      // Predicated region
      $region25: #{tpu_custom_call.1} parent=5 // pred_check
        _
      $region26: #{tpu_custom_call.1} parent=5 // pred_check_branch
        %188 = sbr.rel (%p185) target = $region28
      $region27: #{tpu_custom_call.1} parent=5 // pred_region
        %s189 = ssub.s32 %s23, 1
        %s190 = sadd.s32 %s33, %s34
        %s191 = sadd.s32 %s190, %s35
        %s192 = sld [smem:[#allocation4 + %s191]]
        %s193 = smul.u32 32, %s192
        %p194 = scmp.lt.s32.totalorder %s193, 31
        %s195 = scalar_select %p194, %s193, 31
        %s196 = smul.addr %s195, 8
        %s197 = scalar_lea.vmem %s2, %s196
        %p198 = pneg %p74
        %p199 = pneg %p71
        %s200 = sadd.s32 %s33, %s34
        %s201 = sadd.s32 %s200, %s35
        %s202 = sld [smem:[#allocation4 + %s201]]
        %s203 = smul.u32 2, %s202
        %p204 = scmp.lt.s32.totalorder %s203, 1
        %s205 = scalar_select %p204, %s203, 1
        %s206 = smul.addr %s205, 4
        %s207 = scalar_lea.vmem %s3, %s206
        %p208 = pneg %p106
        %p209 = pneg %p103
        %p210 = pneg %p134
        %p211 = pneg %p131
        %s212 = sand.u32 %s121, 1
        %s213 = scalar_lea.sflag [#allocation7], %s212
        %s214 = sand.u32 %s121, 1
        %s215 = smul.addr %s214, 16
        %s216 = scalar_lea.vmem [#allocation6], %s215
        %s217 = sadd.s32 %s33, %s34
        %s218 = sadd.s32 %s217, %s35
        %s219 = sld [smem:[#allocation4 + %s218]]
        %s220 = smul.u32 32, %s219
        %p221 = scmp.lt.s32.totalorder %s220, 31
        %s222 = scalar_select %p221, %s220, 31
        %s223 = smul.addr %s222, 8
        %s224 = scalar_lea.vmem %s2, %s223
        %s225 = sadd.s32 %s33, %s34
        %s226 = sadd.s32 %s225, %s35
        %s227 = sld [smem:[#allocation4 + %s226]]
        %s228 = smul.u32 32, %s227
        %s229 = sadd.s32 %s33, %s34
        %s230 = sadd.s32 %s229, %s35
        %s231 = sld [smem:[#allocation4 + %s230]]
        %s232 = smul.u32 2, %s231
        %p233 = scmp.lt.s32.totalorder %s232, 1
        %s234 = scalar_select %p233, %s232, 1
        %s235 = smul.addr %s234, 4
        %s236 = scalar_lea.vmem %s3, %s235
        %s237 = sadd.s32 %s33, %s34
        %s238 = sadd.s32 %s237, %s35
        %s239 = sld [smem:[#allocation4 + %s238]]
        %s240 = smul.u32 2, %s239
        %s241 = smul.u32 4, %s34
        %s242 = sadd.s32 %s33, %s34
        %s243 = sld [smem:[#allocation5 + %s242]]
        %p244 = scmp.eq.s32.totalorder %s35, 0
        // Predicated region
        $region29: #{tpu_custom_call.1} parent=27 // pred_check
          %p245 = pneg %p244
        $region30: #{tpu_custom_call.1} parent=27 // pred_check_branch
          %247 = sbr.rel (%p245) target = $region32
        $region31: #{tpu_custom_call.1} parent=27 // pred_region
          %248 = vst [vmem:[#allocation2] sm:$0xff] 0.0
          %249 = vst [vmem:[#allocation2 + $0x8] sm:$0xff] 0.0
        $region32: #{tpu_custom_call.1} parent=27 // pred_fallthru
          _
        %p250 = scmp.lt.s32.totalorder %s35, %s243
        // Predicated region
        $region33: #{tpu_custom_call.1} parent=27 // pred_check
          %p251 = pneg %p250
        $region34: #{tpu_custom_call.1} parent=27 // pred_check_branch
          %253 = sbr.rel (%p251) target = $region36
        $region35: #{tpu_custom_call.1} parent=27 // pred_region
          %s254 = smul.u32 %s33, 512
          %s255 = smul.u32 %s34, 512
          %s256 = sadd.s32 %s254, %s255
          %v257 = vlaneseq
          %v258 = vand.u32 %v257, 127
          %v259 = vadd.s32 %v258, 128
          %v260 = vadd.s32 %v258, 256
          %v261 = vadd.s32 %v258, 384
          %v262 = vld [vmem:[%s224] sm:$0xff]
          %v263 = vld [vmem:[%s224 + $0x8] sm:$0xff]
          %v264 = vld [vmem:[%s224 + $0x10] sm:$0xff]
          %v265 = vld [vmem:[%s224 + $0x18] sm:$0xff]
          %v266 = vld [vmem:[%s224 + $0x20] sm:$0xff]
          %v267 = vld [vmem:[%s224 + $0x28] sm:$0xff]
          %v268 = vld [vmem:[%s224 + $0x30] sm:$0xff]
          %v269 = vld [vmem:[%s224 + $0x38] sm:$0xff]
          %v270 = vld [vmem:[%s224 + $0x40] sm:$0xff]
          %v271 = vld [vmem:[%s224 + $0x48] sm:$0xff]
          %v272 = vld [vmem:[%s224 + $0x50] sm:$0xff]
          %v273 = vld [vmem:[%s224 + $0x58] sm:$0xff]
          %v274 = vld [vmem:[%s224 + $0x60] sm:$0xff]
          %v275 = vld [vmem:[%s224 + $0x68] sm:$0xff]
          %v276 = vld [vmem:[%s224 + $0x70] sm:$0xff]
          %v277 = vld [vmem:[%s224 + $0x78] sm:$0xff]
          %v278 = vld [vmem:[%s224 + $0x80] sm:$0xff]
          %v279 = vld [vmem:[%s224 + $0x88] sm:$0xff]
          %v280 = vld [vmem:[%s224 + $0x90] sm:$0xff]
          %v281 = vld [vmem:[%s224 + $0x98] sm:$0xff]
          %v282 = vld [vmem:[%s224 + $0xa0] sm:$0xff]
          %v283 = vld [vmem:[%s224 + $0xa8] sm:$0xff]
          %v284 = vld [vmem:[%s224 + $0xb0] sm:$0xff]
          %v285 = vld [vmem:[%s224 + $0xb8] sm:$0xff]
          %v286 = vld [vmem:[%s224 + $0xc0] sm:$0xff]
          %v287 = vld [vmem:[%s224 + $0xc8] sm:$0xff]
          %v288 = vld [vmem:[%s224 + $0xd0] sm:$0xff]
          %v289 = vld [vmem:[%s224 + $0xd8] sm:$0xff]
          %v290 = vld [vmem:[%s224 + $0xe0] sm:$0xff]
          %v291 = vld [vmem:[%s224 + $0xe8] sm:$0xff]
          %v292 = vld [vmem:[%s224 + $0xf0] sm:$0xff]
          %v293 = vld [vmem:[%s224 + $0xf8] sm:$0xff]
          %v294 = vstv %s256
          %v295 = vsub.s32 %v262, %v294
          %v296 = vsub.s32 %v263, %v294
          %v297 = vsub.s32 %v264, %v294
          %v298 = vsub.s32 %v265, %v294
          %v299 = vsub.s32 %v266, %v294
          %v300 = vsub.s32 %v267, %v294
          %v301 = vsub.s32 %v268, %v294
          %v302 = vsub.s32 %v269, %v294
          %v303 = vsub.s32 %v270, %v294
          %v304 = vsub.s32 %v271, %v294
          %v305 = vsub.s32 %v272, %v294
          %v306 = vsub.s32 %v273, %v294
          %v307 = vsub.s32 %v274, %v294
          %v308 = vsub.s32 %v275, %v294
          %v309 = vsub.s32 %v276, %v294
          %v310 = vsub.s32 %v277, %v294
          %v311 = vsub.s32 %v278, %v294
          %v312 = vsub.s32 %v279, %v294
          %v313 = vsub.s32 %v280, %v294
          %v314 = vsub.s32 %v281, %v294
          %v315 = vsub.s32 %v282, %v294
          %v316 = vsub.s32 %v283, %v294
          %v317 = vsub.s32 %v284, %v294
          %v318 = vsub.s32 %v285, %v294
          %v319 = vsub.s32 %v286, %v294
          %v320 = vsub.s32 %v287, %v294
          %v321 = vsub.s32 %v288, %v294
          %v322 = vsub.s32 %v289, %v294
          %v323 = vsub.s32 %v290, %v294
          %v324 = vsub.s32 %v291, %v294
          %v325 = vsub.s32 %v292, %v294
          %v326 = vsub.s32 %v293, %v294
          %327 = vset.pattern.permute.xlu0 0
          %328 = vperm.xlu0 %327, %v295
          %v329 = vpop.permute.xlu0 %328
          %330 = vset.pattern.permute.xlu0 0
          %331 = vperm.xlu0 %330, %v296
          %v332 = vpop.permute.xlu0 %331
          %333 = vset.pattern.permute.xlu0 0
          %334 = vperm.xlu0 %333, %v297
          %v335 = vpop.permute.xlu0 %334
          %336 = vset.pattern.permute.xlu0 0
          %337 = vperm.xlu0 %336, %v298
          %v338 = vpop.permute.xlu0 %337
          %339 = vset.pattern.permute.xlu0 0
          %340 = vperm.xlu0 %339, %v299
          %v341 = vpop.permute.xlu0 %340
          %342 = vset.pattern.permute.xlu0 0
          %343 = vperm.xlu0 %342, %v300
          %v344 = vpop.permute.xlu0 %343
          %345 = vset.pattern.permute.xlu0 0
          %346 = vperm.xlu0 %345, %v301
          %v347 = vpop.permute.xlu0 %346
          %348 = vset.pattern.permute.xlu0 0
          %349 = vperm.xlu0 %348, %v302
          %v350 = vpop.permute.xlu0 %349
          %351 = vset.pattern.permute.xlu0 0
          %352 = vperm.xlu0 %351, %v303
          %v353 = vpop.permute.xlu0 %352
          %354 = vset.pattern.permute.xlu0 0
          %355 = vperm.xlu0 %354, %v304
          %v356 = vpop.permute.xlu0 %355
          %357 = vset.pattern.permute.xlu0 0
          %358 = vperm.xlu0 %357, %v305
          %v359 = vpop.permute.xlu0 %358
          %360 = vset.pattern.permute.xlu0 0
          %361 = vperm.xlu0 %360, %v306
          %v362 = vpop.permute.xlu0 %361
          %363 = vset.pattern.permute.xlu0 0
          %364 = vperm.xlu0 %363, %v307
          %v365 = vpop.permute.xlu0 %364
          %366 = vset.pattern.permute.xlu0 0
          %367 = vperm.xlu0 %366, %v308
          %v368 = vpop.permute.xlu0 %367
          %369 = vset.pattern.permute.xlu0 0
          %370 = vperm.xlu0 %369, %v309
          %v371 = vpop.permute.xlu0 %370
          %372 = vset.pattern.permute.xlu0 0
          %373 = vperm.xlu0 %372, %v310
          %v374 = vpop.permute.xlu0 %373
          %375 = vset.pattern.permute.xlu0 0
          %376 = vperm.xlu0 %375, %v311
          %v377 = vpop.permute.xlu0 %376
          %378 = vset.pattern.permute.xlu0 0
          %379 = vperm.xlu0 %378, %v312
          %v380 = vpop.permute.xlu0 %379
          %381 = vset.pattern.permute.xlu0 0
          %382 = vperm.xlu0 %381, %v313
          %v383 = vpop.permute.xlu0 %382
          %384 = vset.pattern.permute.xlu0 0
          %385 = vperm.xlu0 %384, %v314
          %v386 = vpop.permute.xlu0 %385
          %387 = vset.pattern.permute.xlu0 0
          %388 = vperm.xlu0 %387, %v315
          %v389 = vpop.permute.xlu0 %388
          %390 = vset.pattern.permute.xlu0 0
          %391 = vperm.xlu0 %390, %v316
          %v392 = vpop.permute.xlu0 %391
          %393 = vset.pattern.permute.xlu0 0
          %394 = vperm.xlu0 %393, %v317
          %v395 = vpop.permute.xlu0 %394
          %396 = vset.pattern.permute.xlu0 0
          %397 = vperm.xlu0 %396, %v318
          %v398 = vpop.permute.xlu0 %397
          %399 = vset.pattern.permute.xlu0 0
          %400 = vperm.xlu0 %399, %v319
          %v401 = vpop.permute.xlu0 %400
          %402 = vset.pattern.permute.xlu0 0
          %403 = vperm.xlu0 %402, %v320
          %v404 = vpop.permute.xlu0 %403
          %405 = vset.pattern.permute.xlu0 0
          %406 = vperm.xlu0 %405, %v321
          %v407 = vpop.permute.xlu0 %406
          %408 = vset.pattern.permute.xlu0 0
          %409 = vperm.xlu0 %408, %v322
          %v410 = vpop.permute.xlu0 %409
          %411 = vset.pattern.permute.xlu0 0
          %412 = vperm.xlu0 %411, %v323
          %v413 = vpop.permute.xlu0 %412
          %414 = vset.pattern.permute.xlu0 0
          %415 = vperm.xlu0 %414, %v324
          %v416 = vpop.permute.xlu0 %415
          %417 = vset.pattern.permute.xlu0 0
          %418 = vperm.xlu0 %417, %v325
          %v419 = vpop.permute.xlu0 %418
          %420 = vset.pattern.permute.xlu0 0
          %421 = vperm.xlu0 %420, %v326
          %v422 = vpop.permute.xlu0 %421
          %vm423 = vcmp.eq.s32.totalorder %v329, %v258
          %vm424 = vcmp.eq.s32.totalorder %v329, %v259
          %vm425 = vcmp.eq.s32.totalorder %v329, %v260
          %vm426 = vcmp.eq.s32.totalorder %v329, %v261
          %vm427 = vcmp.eq.s32.totalorder %v332, %v258
          %vm428 = vcmp.eq.s32.totalorder %v332, %v259
          %vm429 = vcmp.eq.s32.totalorder %v332, %v260
          %vm430 = vcmp.eq.s32.totalorder %v332, %v261
          %vm431 = vcmp.eq.s32.totalorder %v335, %v258
          %vm432 = vcmp.eq.s32.totalorder %v335, %v259
          %vm433 = vcmp.eq.s32.totalorder %v335, %v260
          %vm434 = vcmp.eq.s32.totalorder %v335, %v261
          %vm435 = vcmp.eq.s32.totalorder %v338, %v258
          %vm436 = vcmp.eq.s32.totalorder %v338, %v259
          %vm437 = vcmp.eq.s32.totalorder %v338, %v260
          %vm438 = vcmp.eq.s32.totalorder %v338, %v261
          %vm439 = vcmp.eq.s32.totalorder %v341, %v258
          %vm440 = vcmp.eq.s32.totalorder %v341, %v259
          %vm441 = vcmp.eq.s32.totalorder %v341, %v260
          %vm442 = vcmp.eq.s32.totalorder %v341, %v261
          %vm443 = vcmp.eq.s32.totalorder %v344, %v258
          %vm444 = vcmp.eq.s32.totalorder %v344, %v259
          %vm445 = vcmp.eq.s32.totalorder %v344, %v260
          %vm446 = vcmp.eq.s32.totalorder %v344, %v261
          %vm447 = vcmp.eq.s32.totalorder %v347, %v258
          %vm448 = vcmp.eq.s32.totalorder %v347, %v259
          %vm449 = vcmp.eq.s32.totalorder %v347, %v260
          %vm450 = vcmp.eq.s32.totalorder %v347, %v261
          %vm451 = vcmp.eq.s32.totalorder %v350, %v258
          %vm452 = vcmp.eq.s32.totalorder %v350, %v259
          %vm453 = vcmp.eq.s32.totalorder %v350, %v260
          %vm454 = vcmp.eq.s32.totalorder %v350, %v261
          %vm455 = vcmp.eq.s32.totalorder %v353, %v258
          %vm456 = vcmp.eq.s32.totalorder %v353, %v259
          %vm457 = vcmp.eq.s32.totalorder %v353, %v260
          %vm458 = vcmp.eq.s32.totalorder %v353, %v261
          %vm459 = vcmp.eq.s32.totalorder %v356, %v258
          %vm460 = vcmp.eq.s32.totalorder %v356, %v259
          %vm461 = vcmp.eq.s32.totalorder %v356, %v260
          %vm462 = vcmp.eq.s32.totalorder %v356, %v261
          %vm463 = vcmp.eq.s32.totalorder %v359, %v258
          %vm464 = vcmp.eq.s32.totalorder %v359, %v259
          %vm465 = vcmp.eq.s32.totalorder %v359, %v260
          %vm466 = vcmp.eq.s32.totalorder %v359, %v261
          %vm467 = vcmp.eq.s32.totalorder %v362, %v258
          %vm468 = vcmp.eq.s32.totalorder %v362, %v259
          %vm469 = vcmp.eq.s32.totalorder %v362, %v260
          %vm470 = vcmp.eq.s32.totalorder %v362, %v261
          %vm471 = vcmp.eq.s32.totalorder %v365, %v258
          %vm472 = vcmp.eq.s32.totalorder %v365, %v259
          %vm473 = vcmp.eq.s32.totalorder %v365, %v260
          %vm474 = vcmp.eq.s32.totalorder %v365, %v261
          %vm475 = vcmp.eq.s32.totalorder %v368, %v258
          %vm476 = vcmp.eq.s32.totalorder %v368, %v259
          %vm477 = vcmp.eq.s32.totalorder %v368, %v260
          %vm478 = vcmp.eq.s32.totalorder %v368, %v261
          %vm479 = vcmp.eq.s32.totalorder %v371, %v258
          %vm480 = vcmp.eq.s32.totalorder %v371, %v259
          %vm481 = vcmp.eq.s32.totalorder %v371, %v260
          %vm482 = vcmp.eq.s32.totalorder %v371, %v261
          %vm483 = vcmp.eq.s32.totalorder %v374, %v258
          %vm484 = vcmp.eq.s32.totalorder %v374, %v259
          %vm485 = vcmp.eq.s32.totalorder %v374, %v260
          %vm486 = vcmp.eq.s32.totalorder %v374, %v261
          %vm487 = vcmp.eq.s32.totalorder %v377, %v258
          %vm488 = vcmp.eq.s32.totalorder %v377, %v259
          %vm489 = vcmp.eq.s32.totalorder %v377, %v260
          %vm490 = vcmp.eq.s32.totalorder %v377, %v261
          %vm491 = vcmp.eq.s32.totalorder %v380, %v258
          %vm492 = vcmp.eq.s32.totalorder %v380, %v259
          %vm493 = vcmp.eq.s32.totalorder %v380, %v260
          %vm494 = vcmp.eq.s32.totalorder %v380, %v261
          %vm495 = vcmp.eq.s32.totalorder %v383, %v258
          %vm496 = vcmp.eq.s32.totalorder %v383, %v259
          %vm497 = vcmp.eq.s32.totalorder %v383, %v260
          %vm498 = vcmp.eq.s32.totalorder %v383, %v261
          %vm499 = vcmp.eq.s32.totalorder %v386, %v258
          %vm500 = vcmp.eq.s32.totalorder %v386, %v259
          %vm501 = vcmp.eq.s32.totalorder %v386, %v260
          %vm502 = vcmp.eq.s32.totalorder %v386, %v261
          %vm503 = vcmp.eq.s32.totalorder %v389, %v258
          %vm504 = vcmp.eq.s32.totalorder %v389, %v259
          %vm505 = vcmp.eq.s32.totalorder %v389, %v260
          %vm506 = vcmp.eq.s32.totalorder %v389, %v261
          %vm507 = vcmp.eq.s32.totalorder %v392, %v258
          %vm508 = vcmp.eq.s32.totalorder %v392, %v259
          %vm509 = vcmp.eq.s32.totalorder %v392, %v260
          %vm510 = vcmp.eq.s32.totalorder %v392, %v261
          %vm511 = vcmp.eq.s32.totalorder %v395, %v258
          %vm512 = vcmp.eq.s32.totalorder %v395, %v259
          %vm513 = vcmp.eq.s32.totalorder %v395, %v260
          %vm514 = vcmp.eq.s32.totalorder %v395, %v261
          %vm515 = vcmp.eq.s32.totalorder %v398, %v258
          %vm516 = vcmp.eq.s32.totalorder %v398, %v259
          %vm517 = vcmp.eq.s32.totalorder %v398, %v260
          %vm518 = vcmp.eq.s32.totalorder %v398, %v261
          %vm519 = vcmp.eq.s32.totalorder %v401, %v258
          %vm520 = vcmp.eq.s32.totalorder %v401, %v259
          %vm521 = vcmp.eq.s32.totalorder %v401, %v260
          %vm522 = vcmp.eq.s32.totalorder %v401, %v261
          %vm523 = vcmp.eq.s32.totalorder %v404, %v258
          %vm524 = vcmp.eq.s32.totalorder %v404, %v259
          %vm525 = vcmp.eq.s32.totalorder %v404, %v260
          %vm526 = vcmp.eq.s32.totalorder %v404, %v261
          %vm527 = vcmp.eq.s32.totalorder %v407, %v258
          %vm528 = vcmp.eq.s32.totalorder %v407, %v259
          %vm529 = vcmp.eq.s32.totalorder %v407, %v260
          %vm530 = vcmp.eq.s32.totalorder %v407, %v261
          %vm531 = vcmp.eq.s32.totalorder %v410, %v258
          %vm532 = vcmp.eq.s32.totalorder %v410, %v259
          %vm533 = vcmp.eq.s32.totalorder %v410, %v260
          %vm534 = vcmp.eq.s32.totalorder %v410, %v261
          %vm535 = vcmp.eq.s32.totalorder %v413, %v258
          %vm536 = vcmp.eq.s32.totalorder %v413, %v259
          %vm537 = vcmp.eq.s32.totalorder %v413, %v260
          %vm538 = vcmp.eq.s32.totalorder %v413, %v261
          %vm539 = vcmp.eq.s32.totalorder %v416, %v258
          %vm540 = vcmp.eq.s32.totalorder %v416, %v259
          %vm541 = vcmp.eq.s32.totalorder %v416, %v260
          %vm542 = vcmp.eq.s32.totalorder %v416, %v261
          %vm543 = vcmp.eq.s32.totalorder %v419, %v258
          %vm544 = vcmp.eq.s32.totalorder %v419, %v259
          %vm545 = vcmp.eq.s32.totalorder %v419, %v260
          %vm546 = vcmp.eq.s32.totalorder %v419, %v261
          %vm547 = vcmp.eq.s32.totalorder %v422, %v258
          %vm548 = vcmp.eq.s32.totalorder %v422, %v259
          %vm549 = vcmp.eq.s32.totalorder %v422, %v260
          %vm550 = vcmp.eq.s32.totalorder %v422, %v261
          %v551 = vsel %vm423, 1, 0
          %v552 = vsel %vm424, 1, 0
          %v553 = vsel %vm425, 1, 0
          %v554 = vsel %vm426, 1, 0
          %v555 = vsel %vm427, 1, 0
          %v556 = vsel %vm428, 1, 0
          %v557 = vsel %vm429, 1, 0
          %v558 = vsel %vm430, 1, 0
          %v559 = vsel %vm431, 1, 0
          %v560 = vsel %vm432, 1, 0
          %v561 = vsel %vm433, 1, 0
          %v562 = vsel %vm434, 1, 0
          %v563 = vsel %vm435, 1, 0
          %v564 = vsel %vm436, 1, 0
          %v565 = vsel %vm437, 1, 0
          %v566 = vsel %vm438, 1, 0
          %v567 = vsel %vm439, 1, 0
          %v568 = vsel %vm440, 1, 0
          %v569 = vsel %vm441, 1, 0
          %v570 = vsel %vm442, 1, 0
          %v571 = vsel %vm443, 1, 0
          %v572 = vsel %vm444, 1, 0
          %v573 = vsel %vm445, 1, 0
          %v574 = vsel %vm446, 1, 0
          %v575 = vsel %vm447, 1, 0
          %v576 = vsel %vm448, 1, 0
          %v577 = vsel %vm449, 1, 0
          %v578 = vsel %vm450, 1, 0
          %v579 = vsel %vm451, 1, 0
          %v580 = vsel %vm452, 1, 0
          %v581 = vsel %vm453, 1, 0
          %v582 = vsel %vm454, 1, 0
          %v583 = vsel %vm455, 1, 0
          %v584 = vsel %vm456, 1, 0
          %v585 = vsel %vm457, 1, 0
          %v586 = vsel %vm458, 1, 0
          %v587 = vsel %vm459, 1, 0
          %v588 = vsel %vm460, 1, 0
          %v589 = vsel %vm461, 1, 0
          %v590 = vsel %vm462, 1, 0
          %v591 = vsel %vm463, 1, 0
          %v592 = vsel %vm464, 1, 0
          %v593 = vsel %vm465, 1, 0
          %v594 = vsel %vm466, 1, 0
          %v595 = vsel %vm467, 1, 0
          %v596 = vsel %vm468, 1, 0
          %v597 = vsel %vm469, 1, 0
          %v598 = vsel %vm470, 1, 0
          %v599 = vsel %vm471, 1, 0
          %v600 = vsel %vm472, 1, 0
          %v601 = vsel %vm473, 1, 0
          %v602 = vsel %vm474, 1, 0
          %v603 = vsel %vm475, 1, 0
          %v604 = vsel %vm476, 1, 0
          %v605 = vsel %vm477, 1, 0
          %v606 = vsel %vm478, 1, 0
          %v607 = vsel %vm479, 1, 0
          %v608 = vsel %vm480, 1, 0
          %v609 = vsel %vm481, 1, 0
          %v610 = vsel %vm482, 1, 0
          %v611 = vsel %vm483, 1, 0
          %v612 = vsel %vm484, 1, 0
          %v613 = vsel %vm485, 1, 0
          %v614 = vsel %vm486, 1, 0
          %v615 = vsel %vm487, 1, 0
          %v616 = vsel %vm488, 1, 0
          %v617 = vsel %vm489, 1, 0
          %v618 = vsel %vm490, 1, 0
          %v619 = vsel %vm491, 1, 0
          %v620 = vsel %vm492, 1, 0
          %v621 = vsel %vm493, 1, 0
          %v622 = vsel %vm494, 1, 0
          %v623 = vsel %vm495, 1, 0
          %v624 = vsel %vm496, 1, 0
          %v625 = vsel %vm497, 1, 0
          %v626 = vsel %vm498, 1, 0
          %v627 = vsel %vm499, 1, 0
          %v628 = vsel %vm500, 1, 0
          %v629 = vsel %vm501, 1, 0
          %v630 = vsel %vm502, 1, 0
          %v631 = vsel %vm503, 1, 0
          %v632 = vsel %vm504, 1, 0
          %v633 = vsel %vm505, 1, 0
          %v634 = vsel %vm506, 1, 0
          %v635 = vsel %vm507, 1, 0
          %v636 = vsel %vm508, 1, 0
          %v637 = vsel %vm509, 1, 0
          %v638 = vsel %vm510, 1, 0
          %v639 = vsel %vm511, 1, 0
          %v640 = vsel %vm512, 1, 0
          %v641 = vsel %vm513, 1, 0
          %v642 = vsel %vm514, 1, 0
          %v643 = vsel %vm515, 1, 0
          %v644 = vsel %vm516, 1, 0
          %v645 = vsel %vm517, 1, 0
          %v646 = vsel %vm518, 1, 0
          %v647 = vsel %vm519, 1, 0
          %v648 = vsel %vm520, 1, 0
          %v649 = vsel %vm521, 1, 0
          %v650 = vsel %vm522, 1, 0
          %v651 = vsel %vm523, 1, 0
          %v652 = vsel %vm524, 1, 0
          %v653 = vsel %vm525, 1, 0
          %v654 = vsel %vm526, 1, 0
          %v655 = vsel %vm527, 1, 0
          %v656 = vsel %vm528, 1, 0
          %v657 = vsel %vm529, 1, 0
          %v658 = vsel %vm530, 1, 0
          %v659 = vsel %vm531, 1, 0
          %v660 = vsel %vm532, 1, 0
          %v661 = vsel %vm533, 1, 0
          %v662 = vsel %vm534, 1, 0
          %v663 = vsel %vm535, 1, 0
          %v664 = vsel %vm536, 1, 0
          %v665 = vsel %vm537, 1, 0
          %v666 = vsel %vm538, 1, 0
          %v667 = vsel %vm539, 1, 0
          %v668 = vsel %vm540, 1, 0
          %v669 = vsel %vm541, 1, 0
          %v670 = vsel %vm542, 1, 0
          %v671 = vsel %vm543, 1, 0
          %v672 = vsel %vm544, 1, 0
          %v673 = vsel %vm545, 1, 0
          %v674 = vsel %vm546, 1, 0
          %v675 = vsel %vm547, 1, 0
          %v676 = vsel %vm548, 1, 0
          %v677 = vsel %vm549, 1, 0
          %v678 = vsel %vm550, 1, 0
          %v679 = vcvt.s32.f32 %v551
          %v680 = vcvt.s32.f32 %v552
          %v681 = vcvt.s32.f32 %v553
          %v682 = vcvt.s32.f32 %v554
          %v683 = vcvt.s32.f32 %v555
          %v684 = vcvt.s32.f32 %v556
          %v685 = vcvt.s32.f32 %v557
          %v686 = vcvt.s32.f32 %v558
          %v687 = vcvt.s32.f32 %v559
          %v688 = vcvt.s32.f32 %v560
          %v689 = vcvt.s32.f32 %v561
          %v690 = vcvt.s32.f32 %v562
          %v691 = vcvt.s32.f32 %v563
          %v692 = vcvt.s32.f32 %v564
          %v693 = vcvt.s32.f32 %v565
          %v694 = vcvt.s32.f32 %v566
          %v695 = vcvt.s32.f32 %v567
          %v696 = vcvt.s32.f32 %v568
          %v697 = vcvt.s32.f32 %v569
          %v698 = vcvt.s32.f32 %v570
          %v699 = vcvt.s32.f32 %v571
          %v700 = vcvt.s32.f32 %v572
          %v701 = vcvt.s32.f32 %v573
          %v702 = vcvt.s32.f32 %v574
          %v703 = vcvt.s32.f32 %v575
          %v704 = vcvt.s32.f32 %v576
          %v705 = vcvt.s32.f32 %v577
          %v706 = vcvt.s32.f32 %v578
          %v707 = vcvt.s32.f32 %v579
          %v708 = vcvt.s32.f32 %v580
          %v709 = vcvt.s32.f32 %v581
          %v710 = vcvt.s32.f32 %v582
          %v711 = vcvt.s32.f32 %v583
          %v712 = vcvt.s32.f32 %v584
          %v713 = vcvt.s32.f32 %v585
          %v714 = vcvt.s32.f32 %v586
          %v715 = vcvt.s32.f32 %v587
          %v716 = vcvt.s32.f32 %v588
          %v717 = vcvt.s32.f32 %v589
          %v718 = vcvt.s32.f32 %v590
          %v719 = vcvt.s32.f32 %v591
          %v720 = vcvt.s32.f32 %v592
          %v721 = vcvt.s32.f32 %v593
          %v722 = vcvt.s32.f32 %v594
          %v723 = vcvt.s32.f32 %v595
          %v724 = vcvt.s32.f32 %v596
          %v725 = vcvt.s32.f32 %v597
          %v726 = vcvt.s32.f32 %v598
          %v727 = vcvt.s32.f32 %v599
          %v728 = vcvt.s32.f32 %v600
          %v729 = vcvt.s32.f32 %v601
          %v730 = vcvt.s32.f32 %v602
          %v731 = vcvt.s32.f32 %v603
          %v732 = vcvt.s32.f32 %v604
          %v733 = vcvt.s32.f32 %v605
          %v734 = vcvt.s32.f32 %v606
          %v735 = vcvt.s32.f32 %v607
          %v736 = vcvt.s32.f32 %v608
          %v737 = vcvt.s32.f32 %v609
          %v738 = vcvt.s32.f32 %v610
          %v739 = vcvt.s32.f32 %v611
          %v740 = vcvt.s32.f32 %v612
          %v741 = vcvt.s32.f32 %v613
          %v742 = vcvt.s32.f32 %v614
          %v743 = vcvt.s32.f32 %v615
          %v744 = vcvt.s32.f32 %v616
          %v745 = vcvt.s32.f32 %v617
          %v746 = vcvt.s32.f32 %v618
          %v747 = vcvt.s32.f32 %v619
          %v748 = vcvt.s32.f32 %v620
          %v749 = vcvt.s32.f32 %v621
          %v750 = vcvt.s32.f32 %v622
          %v751 = vcvt.s32.f32 %v623
          %v752 = vcvt.s32.f32 %v624
          %v753 = vcvt.s32.f32 %v625
          %v754 = vcvt.s32.f32 %v626
          %v755 = vcvt.s32.f32 %v627
          %v756 = vcvt.s32.f32 %v628
          %v757 = vcvt.s32.f32 %v629
          %v758 = vcvt.s32.f32 %v630
          %v759 = vcvt.s32.f32 %v631
          %v760 = vcvt.s32.f32 %v632
          %v761 = vcvt.s32.f32 %v633
          %v762 = vcvt.s32.f32 %v634
          %v763 = vcvt.s32.f32 %v635
          %v764 = vcvt.s32.f32 %v636
          %v765 = vcvt.s32.f32 %v637
          %v766 = vcvt.s32.f32 %v638
          %v767 = vcvt.s32.f32 %v639
          %v768 = vcvt.s32.f32 %v640
          %v769 = vcvt.s32.f32 %v641
          %v770 = vcvt.s32.f32 %v642
          %v771 = vcvt.s32.f32 %v643
          %v772 = vcvt.s32.f32 %v644
          %v773 = vcvt.s32.f32 %v645
          %v774 = vcvt.s32.f32 %v646
          %v775 = vcvt.s32.f32 %v647
          %v776 = vcvt.s32.f32 %v648
          %v777 = vcvt.s32.f32 %v649
          %v778 = vcvt.s32.f32 %v650
          %v779 = vcvt.s32.f32 %v651
          %v780 = vcvt.s32.f32 %v652
          %v781 = vcvt.s32.f32 %v653
          %v782 = vcvt.s32.f32 %v654
          %v783 = vcvt.s32.f32 %v655
          %v784 = vcvt.s32.f32 %v656
          %v785 = vcvt.s32.f32 %v657
          %v786 = vcvt.s32.f32 %v658
          %v787 = vcvt.s32.f32 %v659
          %v788 = vcvt.s32.f32 %v660
          %v789 = vcvt.s32.f32 %v661
          %v790 = vcvt.s32.f32 %v662
          %v791 = vcvt.s32.f32 %v663
          %v792 = vcvt.s32.f32 %v664
          %v793 = vcvt.s32.f32 %v665
          %v794 = vcvt.s32.f32 %v666
          %v795 = vcvt.s32.f32 %v667
          %v796 = vcvt.s32.f32 %v668
          %v797 = vcvt.s32.f32 %v669
          %v798 = vcvt.s32.f32 %v670
          %v799 = vcvt.s32.f32 %v671
          %v800 = vcvt.s32.f32 %v672
          %v801 = vcvt.s32.f32 %v673
          %v802 = vcvt.s32.f32 %v674
          %v803 = vcvt.s32.f32 %v675
          %v804 = vcvt.s32.f32 %v676
          %v805 = vcvt.s32.f32 %v677
          %v806 = vcvt.s32.f32 %v678
          %v807 = vld [vmem:[#allocation2] sm:$0xff]
          %v808 = vld [vmem:[#allocation2 + $0x8] sm:$0xff]
          %v809 = vld [vmem:[%s236] sm:$0xff]
          %v811 = vcombine.high %v809, %v809
          %813 = vmatprep.subr.mxu0 %v740
          %814 = vmatpush1.msra.mxu0 %v739
          %815 = vmatprep.subr.mxu0 %v736
          %816 = vmatpush1.msra.mxu0 %v735
          %817 = vmatprep.subr.mxu0 %v732
          %818 = vmatpush1.msra.mxu0 %v731
          %819 = vmatprep.subr.mxu0 %v728
          %820 = vmatpush1.msra.mxu0 %v727
          %821 = vmatprep.subr.mxu0 %v724
          %822 = vmatpush1.msra.mxu0 %v723
          %823 = vmatprep.subr.mxu0 %v720
          %824 = vmatpush1.msra.mxu0 %v719
          %825 = vmatprep.subr.mxu0 %v716
          %826 = vmatpush1.msra.mxu0 %v715
          %827 = vmatprep.subr.mxu0 %v712
          %828 = vmatpush1.msra.mxu0 %v711
          %829 = vmatprep.subr.mxu0 %v708
          %830 = vmatpush1.msra.mxu0 %v707
          %831 = vmatprep.subr.mxu0 %v704
          %832 = vmatpush1.msra.mxu0 %v703
          %833 = vmatprep.subr.mxu0 %v700
          %834 = vmatpush1.msra.mxu0 %v699
          %835 = vmatprep.subr.mxu0 %v696
          %836 = vmatpush1.msra.mxu0 %v695
          %837 = vmatprep.subr.mxu0 %v692
          %838 = vmatpush1.msra.mxu0 %v691
          %839 = vmatprep.subr.mxu0 %v688
          %840 = vmatpush1.msra.mxu0 %v687
          %841 = vmatprep.subr.mxu0 %v684
          %842 = vmatpush1.msra.mxu0 %v683
          %843 = vmatprep.subr.mxu0 %v680
          %844 = vmatpush1.msra.mxu0 %v679
          %845 = vmatprep.subr.mxu0 %v804
          %846 = vmatpush2.msra.mxu0 %v803
          %847 = vmatprep.subr.mxu0 %v800
          %848 = vmatpush2.msra.mxu0 %v799
          %849 = vmatprep.subr.mxu0 %v796
          %850 = vmatpush2.msra.mxu0 %v795
          %851 = vmatprep.subr.mxu0 %v792
          %852 = vmatpush2.msra.mxu0 %v791
          %853 = vmatprep.subr.mxu0 %v788
          %854 = vmatpush2.msra.mxu0 %v787
          %855 = vmatprep.subr.mxu0 %v784
          %856 = vmatpush2.msra.mxu0 %v783
          %857 = vmatprep.subr.mxu0 %v780
          %858 = vmatpush2.msra.mxu0 %v779
          %859 = vmatprep.subr.mxu0 %v776
          %860 = vmatpush2.msra.mxu0 %v775
          %861 = vmatprep.subr.mxu0 %v772
          %862 = vmatpush2.msra.mxu0 %v771
          %863 = vmatprep.subr.mxu0 %v768
          %864 = vmatpush2.msra.mxu0 %v767
          %865 = vmatprep.subr.mxu0 %v764
          %866 = vmatpush2.msra.mxu0 %v763
          %867 = vmatprep.subr.mxu0 %v760
          %868 = vmatpush2.msra.mxu0 %v759
          %869 = vmatprep.subr.mxu0 %v756
          %870 = vmatpush2.msra.mxu0 %v755
          %871 = vmatprep.subr.mxu0 %v752
          %872 = vmatpush2.msra.mxu0 %v751
          %873 = vmatprep.subr.mxu0 %v748
          %874 = vmatpush2.msra.mxu0 %v747
          %875 = vmatprep.subr.mxu0 %v744
          %876 = vmatpush2.msra.mxu0 %v743
          %877 = vmatprep.mubr.f32.mxu0 %v811
          %878 = vmatmul.mubr.f32.gmra.mxu0 %v809
          %v879 = vpop.f32.mrf.mxu0
          %v880 = vadd.f32 0.0, %v879
          %v881 = vpop.f32.mrf.mxu0
          %v882 = vadd.f32 0.0, %v881
          %883 = vdwg.mxu0
          %884 = vmatprep.subr.mxu0 %v742
          %885 = vmatpush1.msra.mxu0 %v741
          %886 = vmatprep.subr.mxu0 %v738
          %887 = vmatpush1.msra.mxu0 %v737
          %888 = vmatprep.subr.mxu0 %v734
          %889 = vmatpush1.msra.mxu0 %v733
          %890 = vmatprep.subr.mxu0 %v730
          %891 = vmatpush1.msra.mxu0 %v729
          %892 = vmatprep.subr.mxu0 %v726
          %893 = vmatpush1.msra.mxu0 %v725
          %894 = vmatprep.subr.mxu0 %v722
          %895 = vmatpush1.msra.mxu0 %v721
          %896 = vmatprep.subr.mxu0 %v718
          %897 = vmatpush1.msra.mxu0 %v717
          %898 = vmatprep.subr.mxu0 %v714
          %899 = vmatpush1.msra.mxu0 %v713
          %900 = vmatprep.subr.mxu0 %v710
          %901 = vmatpush1.msra.mxu0 %v709
          %902 = vmatprep.subr.mxu0 %v706
          %903 = vmatpush1.msra.mxu0 %v705
          %904 = vmatprep.subr.mxu0 %v702
          %905 = vmatpush1.msra.mxu0 %v701
          %906 = vmatprep.subr.mxu0 %v698
          %907 = vmatpush1.msra.mxu0 %v697
          %908 = vmatprep.subr.mxu0 %v694
          %909 = vmatpush1.msra.mxu0 %v693
          %910 = vmatprep.subr.mxu0 %v690
          %911 = vmatpush1.msra.mxu0 %v689
          %912 = vmatprep.subr.mxu0 %v686
          %913 = vmatpush1.msra.mxu0 %v685
          %914 = vmatprep.subr.mxu0 %v682
          %915 = vmatpush1.msra.mxu0 %v681
          %916 = vmatprep.subr.mxu0 %v806
          %917 = vmatpush2.msra.mxu0 %v805
          %918 = vmatprep.subr.mxu0 %v802
          %919 = vmatpush2.msra.mxu0 %v801
          %920 = vmatprep.subr.mxu0 %v798
          %921 = vmatpush2.msra.mxu0 %v797
          %922 = vmatprep.subr.mxu0 %v794
          %923 = vmatpush2.msra.mxu0 %v793
          %924 = vmatprep.subr.mxu0 %v790
          %925 = vmatpush2.msra.mxu0 %v789
          %926 = vmatprep.subr.mxu0 %v786
          %927 = vmatpush2.msra.mxu0 %v785
          %928 = vmatprep.subr.mxu0 %v782
          %929 = vmatpush2.msra.mxu0 %v781
          %930 = vmatprep.subr.mxu0 %v778
          %931 = vmatpush2.msra.mxu0 %v777
          %932 = vmatprep.subr.mxu0 %v774
          %933 = vmatpush2.msra.mxu0 %v773
          %934 = vmatprep.subr.mxu0 %v770
          %935 = vmatpush2.msra.mxu0 %v769
          %936 = vmatprep.subr.mxu0 %v766
          %937 = vmatpush2.msra.mxu0 %v765
          %938 = vmatprep.subr.mxu0 %v762
          %939 = vmatpush2.msra.mxu0 %v761
          %940 = vmatprep.subr.mxu0 %v758
          %941 = vmatpush2.msra.mxu0 %v757
          %942 = vmatprep.subr.mxu0 %v754
          %943 = vmatpush2.msra.mxu0 %v753
          %944 = vmatprep.subr.mxu0 %v750
          %945 = vmatpush2.msra.mxu0 %v749
          %946 = vmatprep.subr.mxu0 %v746
          %947 = vmatpush2.msra.mxu0 %v745
          %948 = vmatprep.mubr.f32.mxu0 %v811
          %949 = vmatmul.mubr.f32.gmra.mxu0 %v809
          %v950 = vpop.f32.mrf.mxu0
          %v951 = vadd.f32 0.0, %v950
          %v952 = vpop.f32.mrf.mxu0
          %v953 = vadd.f32 0.0, %v952
          %954 = vdwg.mxu0
          %v959 = vcombine.low %v880, %v882
          %v960 = vcombine.low %v951, %v953
          %v963 = vadd.f32 %v807, %v959
          %v964 = vadd.f32 %v808, %v960
          %965 = vst [vmem:[#allocation2] sm:$0xff] %v963
          %966 = vst [vmem:[#allocation2 + $0x8] sm:$0xff] %v964
        $region36: #{tpu_custom_call.1} parent=27 // pred_fallthru
          _
        // Predicated region
        $region37: #{tpu_custom_call.1} parent=27 // pred_check
          %p967 = pneg %p244
        $region38: #{tpu_custom_call.1} parent=27 // pred_check_branch
          %969 = sbr.rel (%p967) target = $region40
        $region39: #{tpu_custom_call.1} parent=27 // pred_region
          %v970 = vld [vmem:[#allocation2] sm:$0xff]
          %v971 = vld [vmem:[#allocation2 + $0x8] sm:$0xff]
          %972 = vst [vmem:[%s216] sm:$0xff] %v970
          %973 = vst [vmem:[%s216 + $0x8] sm:$0xff] %v971
        $region40: #{tpu_custom_call.1} parent=27 // pred_fallthru
          _
        %s974 = sand.u32 %s121, 1
        %s975 = scalar_lea.sflag [#allocation7], %s974
        %s976 = sand.u32 %s121, 1
        %s977 = smul.addr %s976, 16
        %s978 = scalar_lea.vmem [#allocation6], %s977
        // Predicated region
        $region41: #{tpu_custom_call.1} parent=27 // pred_check
          %p979 = pneg %p131
        $region42: #{tpu_custom_call.1} parent=27 // pred_check_branch
          %981 = sbr.rel (%p979) target = $region44
        $region43: #{tpu_custom_call.1} parent=27 // pred_region
          %s982 = smul.u32 4, %s34
          %s984 = ssub.s32 256, 256
          %985 = vsyncadd %s975, %s984
          %s986 = smul.addr %s33, 4
          %s987 = sadd.s32 %s982, %s986
          %s988 = smul.addr %s987, 64
          %s989 = scalar_lea.hbm %s4, %s988
          %s991 = sshll.u32 %s978, 4
          %s992 = int_to_ptr.vmem [resolvable:$true] %s991
          %994 = dma.vmem_to_hbm [thread:$0]  %s992, 256, %s989, %s975
        $region44: #{tpu_custom_call.1} parent=27 // pred_fallthru
          _
      $region28: #{tpu_custom_call.1} parent=5 // pred_fallthru
        _
      %p995 = scmp.le.s32.totalorder 2, %s23
      // Predicated region
      $region45: #{tpu_custom_call.1} parent=5 // pred_check
        %p996 = pneg %p995
      $region46: #{tpu_custom_call.1} parent=5 // pred_check_branch
        %998 = sbr.rel (%p996) target = $region48
      $region47: #{tpu_custom_call.1} parent=5 // pred_region
        %s999 = ssub.s32 %s23, 2
        // Predicated region
        $region49: #{tpu_custom_call.1} parent=47 // pred_check
          %p1000 = pneg %p137
        $region50: #{tpu_custom_call.1} parent=47 // pred_check_branch
          %1002 = sbr.rel (%p1000) target = $region52
        $region51: #{tpu_custom_call.1} parent=47 // pred_region
          %s1003 = sand.u32 %s122, 1
          %s1004 = scalar_lea.sflag [#allocation7], %s1003
          %s1005 = sand.u32 %s122, 1
          %s1006 = smul.addr %s1005, 16
          %s1007 = scalar_lea.vmem [#allocation6], %s1006
          %1008 = dma.done %s1004, 256
        $region52: #{tpu_custom_call.1} parent=47 // pred_fallthru
          _
      $region48: #{tpu_custom_call.1} parent=5 // pred_fallthru
        _
    $region6: #{tpu_custom_call.1} parent=1 // loop_footer
      %s27 = sadd.s32 1, %s23
    $region7: #{tpu_custom_call.1} parent=1 // loop_footer_branch
      %22 = sbr.rel target = $region3
    $region8: #{tpu_custom_call.1} parent=1 // loop_exit
      _
    %1009 = vsyncpa [#allocation7], 1
    %s1010 = scalar_lea.sflag [#allocation7], 1
    %1011 = vsyncpa %s1010, 1

</llo_original>
